<compile_context>
chip_gen: v6e
topology: v6e:2x2x1
jax: 0.10.0
libtpu: 0.0.40
codegen_flags: <defaults>
</compile_context>

<pallas_src>
import functools

import jax
import jax.numpy as jnp
from jax import lax
from jax.experimental import pallas as pl
from jax.experimental.pallas import tpu as pltpu

_LANE = 128
_MAX_TM = 1024  # beyond this the ~0.35us/step overhead is already <1%


def _round_up(a, b):
    return -(-a // b) * b


def _sublane_multiple(dtype):
    # Sub-32-bit dtypes pack along sublanes: keep TM a multiple of the packing
    # factor so loads/stores stay unmasked and sublane-dense.
    return {4: 8, 2: 16, 1: 32}.get(jnp.dtype(dtype).itemsize, 8)


def _vmem_capacity_bytes():
    """Per-TensorCore VMEM capacity; conservative fallback if the query fails."""
    try:
        cap = int(pltpu.get_tpu_info().vmem_capacity_bytes)
        if cap > 0:
            return cap
    except Exception:
        pass
    return 64 * 1024 * 1024  # v7x per-TensorCore size (smallest generation)


def _min_grid_steps():
    # Keep >= 2 row-grid steps only when the chip has two TensorCores
    # (v7x megacore) so the "parallel" axis can actually be split; on 1-TC
    # chips (v5e/v6e) extra steps are pure per-step overhead.
    try:
        kind = (jax.devices()[0].device_kind or "").lower()
    except Exception:
        kind = ""
    return 2 if ("v7" in kind or "7x" in kind) else 1


def _pick_tm(rows, hidden_padded, dtype, budget, min_steps):
    """Largest dtype-aware row tile whose working set fits the VMEM budget."""
    itemsize = jnp.dtype(dtype).itemsize
    sub = _sublane_multiple(dtype)

    # Per-row VMEM bytes: double-buffered input + output tiles (input dtype)
    # plus roughly one full-tile f32 temporary the compiler may keep live.
    per_row = 2 * 2 * hidden_padded * itemsize + hidden_padded * 4

    tm = max(sub, (budget // per_row) // sub * sub)
    tm = min(tm, _MAX_TM)

    rows_up = _round_up(rows, sub)
    tm = min(tm, rows_up)

    # On megacore, keep at least `min_steps` grid steps so both TensorCores
    # get work; skipped entirely on single-TC chips.
    if min_steps > 1 and rows > min_steps * sub:
        cap = _round_up(-(-rows // min_steps), sub)
        tm = min(tm, max(sub, cap))

    return max(sub, (tm // sub) * sub)


def _layernorm_kernel(x_ref, w_ref, b_ref, o_ref, *, eps, inv_hidden, n_pad):
    # x_ref: (TM, H_pad) tile; w_ref/b_ref: (1, H_pad).
    # Two-pass statistics (numerically stable): pass 1 -> mean,
    # pass 2 -> centered sum of squares.  x_ref re-reads are VMEM-local and
    # cheap (3 vld/cycle); avoid pinning a full-tile f32 copy across both
    # passes so large TM does not spill.
    mean = jnp.sum(x_ref[...].astype(jnp.float32), axis=-1, keepdims=True) * inv_hidden

    xc = x_ref[...].astype(jnp.float32) - mean
    sumsq = jnp.sum(xc * xc, axis=-1, keepdims=True)
    if n_pad:
        # Padded lanes hold zeros, so each contributes exactly mean^2 to the
        # centered sum of squares; subtract that contribution exactly.
        sumsq = sumsq - jnp.float32(n_pad) * mean * mean
    var = jnp.maximum(sumsq * inv_hidden, 0.0)
    inv = lax.rsqrt(var + eps)

    w = w_ref[...].astype(jnp.float32)
    b = b_ref[...].astype(jnp.float32)
    o_ref[...] = (xc * inv * w + b).astype(o_ref.dtype)


def mixed_fused_layer_norm(x, weight, bias, normalized_shape, eps=1e-5, *, tm=None):
    """LayerNorm over trailing `normalized_shape` dims with affine params."""
    if isinstance(normalized_shape, int):
        normalized_shape = (normalized_shape,)
    normalized_shape = tuple(normalized_shape)
    n_norm = len(normalized_shape)
    assert x.shape[-n_norm:] == normalized_shape, (x.shape, normalized_shape)

    hidden = 1
    for d in normalized_shape:
        hidden *= d
    rows = x.size // hidden

    x2d = x.reshape(rows, hidden)
    w2d = weight.reshape(1, hidden)
    b2d = bias.reshape(1, hidden)

    # Lane-dense padding: pad the reduction axis to a multiple of 128 so the
    # output stores are unmasked full-lane vst (biggest measured lever).
    # TODO(synk): for tiny hidden (<< 128) pack several rows into the lane axis
    # instead of padding, to avoid the 128/H lane-bandwidth waste.
    h_pad = _round_up(hidden, _LANE) if hidden % _LANE else hidden
    n_pad = h_pad - hidden
    if n_pad:
        x2d = jnp.pad(x2d, ((0, 0), (0, n_pad)))
        w2d = jnp.pad(w2d, ((0, 0), (0, n_pad)))
        b2d = jnp.pad(b2d, ((0, 0), (0, n_pad)))

    vmem_cap = _vmem_capacity_bytes()
    budget = int(vmem_cap * 0.40)        # working set for the row tiles
    vmem_limit = int(vmem_cap * 0.75)    # scoped VMEM limit handed to Mosaic
    min_steps = _min_grid_steps()

    if tm is None:
        tm = _pick_tm(rows, h_pad, x.dtype, budget, min_steps)

    # Estimate the actual VMEM requirement for the chosen tile and make sure
    # the scoped limit covers it; bail out loudly instead of OOM-ing Mosaic.
    itemsize = jnp.dtype(x.dtype).itemsize
    required = 2 * 2 * tm * h_pad * itemsize          # double-buffered in + out
    required += tm * h_pad * 4                        # f32 temporary in the body
    required += 2 * 2 * h_pad * itemsize              # weight + bias buffers
    required += 2 * 1024 * 1024                       # misc / compiler scratch
    if required > vmem_cap:
        # TODO(synk): implement the hidden-split path (second 'arbitrary' grid
        # axis over hidden with VMEM mean/var accumulators) for extreme widths.
        raise NotImplementedError(
            f"hidden={hidden} too large for a single-tile reduction "
            f"(needs ~{required >> 20} MiB VMEM, capacity {vmem_cap >> 20} MiB)")
    vmem_limit = min(vmem_cap, max(vmem_limit, required))

    grid = (-(-rows // tm),)  # ragged last block handled by Pallas masking

    out2d = pl.pallas_call(
        functools.partial(_layernorm_kernel, eps=float(eps),
                          inv_hidden=1.0 / float(hidden), n_pad=int(n_pad)),
        out_shape=jax.ShapeDtypeStruct((rows, h_pad), x.dtype),
        grid_spec=pltpu.PrefetchScalarGridSpec(
            num_scalar_prefetch=0,
            grid=grid,
            in_specs=[
                pl.BlockSpec((tm, h_pad), lambda i: (i, 0)),
                pl.BlockSpec((1, h_pad), lambda i: (0, 0)),
                pl.BlockSpec((1, h_pad), lambda i: (0, 0)),
            ],
            out_specs=pl.BlockSpec((tm, h_pad), lambda i: (i, 0)),
        ),
        compiler_params=pltpu.CompilerParams(
            dimension_semantics=("parallel",),
            vmem_limit_bytes=int(vmem_limit),
        ),
    )(x2d, w2d, b2d)

    if n_pad:
        out2d = out2d[:, :hidden]
    return out2d.reshape(x.shape)


def reference_layer_norm(x, weight, bias, normalized_shape, eps=1e-5):
    if isinstance(normalized_shape, int):
        normalized_shape = (normalized_shape,)
    axes = tuple(range(x.ndim - len(normalized_shape), x.ndim))
    xf = x.astype(jnp.float32)
    mean = jnp.mean(xf, axis=axes, keepdims=True)
    var = jnp.mean((xf - mean) ** 2, axis=axes, keepdims=True)
    y = (xf - mean) * lax.rsqrt(var + eps)
    return (y * weight.astype(jnp.float32) + bias.astype(jnp.float32)).astype(x.dtype)


if __name__ == "__main__":
    # Shapes implied by the module: input (..., *normalized_shape).
    batch, seq, hidden = 2, 8, 32
    normalized_shape = (hidden,)
    eps = 1e-5

    key = jax.random.PRNGKey(0)
    x = jax.random.normal(key, (batch, seq, hidden), dtype=jnp.float32)

    # Deterministic parameter init matching reset_parameters():
    # weight = ones, bias = zeros.
    weight = jnp.ones(normalized_shape, dtype=jnp.float32)
    bias = jnp.zeros(normalized_shape, dtype=jnp.float32)

    out = mixed_fused_layer_norm(x, weight, bias, normalized_shape, eps)
    out = jax.block_until_ready(out)

    ref = reference_layer_norm(x, weight, bias, normalized_shape, eps)
    assert out.shape == x.shape and out.dtype == x.dtype
    assert jnp.allclose(out, ref, atol=1e-5, rtol=1e-5), "mismatch vs reference"

    print("KERNEL_OK")
</pallas_src>

<mosaic_0001>
module attributes {stable_mosaic.version = 11 : i64} {
  func.func @_layernorm_kernel(%arg0: i32, %arg1: memref<16x128xf32, #tpu.memory_space<vmem>>, %arg2: memref<1x128xf32, #tpu.memory_space<vmem>>, %arg3: memref<1x128xf32, #tpu.memory_space<vmem>>, %arg4: memref<16x128xf32, #tpu.memory_space<vmem>>) attributes {dimension_semantics = [#tpu.dimension_semantics<parallel>], iteration_bounds = array<i64: 1>, scalar_prefetch = 0 : i64, scratch_operands = 0 : i64, tpu.core_type = #tpu.core_type<tc>, window_params = [{transform_indices = @transform_0, window_bounds = array<i64: 16, 128>}, {pipeline_mode = #tpu.pipeline_mode<synchronous>, transform_indices = @transform_1, window_bounds = array<i64: 1, 128>}, {pipeline_mode = #tpu.pipeline_mode<synchronous>, transform_indices = @transform_2, window_bounds = array<i64: 1, 128>}, {transform_indices = @transform_3, window_bounds = array<i64: 16, 128>}]} {
    %c0 = arith.constant 0 : index
    %c0_0 = arith.constant 0 : index
    %0 = vector.load %arg1[%c0, %c0_0] : memref<16x128xf32, #tpu.memory_space<vmem>>, vector<16x128xf32>
    %cst = arith.constant dense<0.000000e+00> : vector<16xf32>
    %1 = vector.multi_reduction <add>, %0, %cst [1] : vector<16x128xf32> to vector<16xf32>
    %2 = vector.shape_cast %1 : vector<16xf32> to vector<16x1xf32>
    %cst_1 = arith.constant 3.125000e-02 : f32
    %3 = vector.broadcast %cst_1 : f32 to vector<16x1xf32>
    %4 = arith.mulf %2, %3 : vector<16x1xf32>
    %c0_2 = arith.constant 0 : index
    %c0_3 = arith.constant 0 : index
    %5 = vector.load %arg1[%c0_2, %c0_3] : memref<16x128xf32, #tpu.memory_space<vmem>>, vector<16x128xf32>
    %6 = vector.broadcast %4 : vector<16x1xf32> to vector<16x128xf32>
    %7 = arith.subf %5, %6 : vector<16x128xf32>
    %8 = arith.mulf %7, %7 : vector<16x128xf32>
    %cst_4 = arith.constant dense<0.000000e+00> : vector<16xf32>
    %9 = vector.multi_reduction <add>, %8, %cst_4 [1] : vector<16x128xf32> to vector<16xf32>
    %10 = vector.shape_cast %9 : vector<16xf32> to vector<16x1xf32>
    %cst_5 = arith.constant 9.600000e+01 : f32
    %11 = vector.broadcast %cst_5 : f32 to vector<16x1xf32>
    %12 = arith.mulf %11, %4 : vector<16x1xf32>
    %13 = arith.mulf %12, %4 : vector<16x1xf32>
    %14 = arith.subf %10, %13 : vector<16x1xf32>
    %cst_6 = arith.constant 3.125000e-02 : f32
    %15 = vector.broadcast %cst_6 : f32 to vector<16x1xf32>
    %16 = arith.mulf %14, %15 : vector<16x1xf32>
    %cst_7 = arith.constant 0.000000e+00 : f32
    %17 = vector.broadcast %cst_7 : f32 to vector<16x1xf32>
    %18 = arith.maximumf %16, %17 : vector<16x1xf32>
    %cst_8 = arith.constant 9.99999974E-6 : f32
    %19 = vector.broadcast %cst_8 : f32 to vector<16x1xf32>
    %20 = arith.addf %18, %19 : vector<16x1xf32>
    %21 = math.rsqrt %20 : vector<16x1xf32>
    %c0_9 = arith.constant 0 : index
    %c0_10 = arith.constant 0 : index
    %22 = vector.load %arg2[%c0_9, %c0_10] : memref<1x128xf32, #tpu.memory_space<vmem>>, vector<1x128xf32>
    %c0_11 = arith.constant 0 : index
    %c0_12 = arith.constant 0 : index
    %23 = vector.load %arg3[%c0_11, %c0_12] : memref<1x128xf32, #tpu.memory_space<vmem>>, vector<1x128xf32>
    %24 = vector.broadcast %21 : vector<16x1xf32> to vector<16x128xf32>
    %25 = arith.mulf %7, %24 : vector<16x128xf32>
    %26 = vector.broadcast %22 : vector<1x128xf32> to vector<16x128xf32>
    %27 = arith.mulf %25, %26 : vector<16x128xf32>
    %28 = vector.broadcast %23 : vector<1x128xf32> to vector<16x128xf32>
    %29 = arith.addf %27, %28 : vector<16x128xf32>
    %c0_13 = arith.constant 0 : index
    %c0_14 = arith.constant 0 : index
    %30 = vector.load %arg4[%c0_13, %c0_14] : memref<16x128xf32, #tpu.memory_space<vmem>>, vector<16x128xf32>
    tpu.vector_store %arg4[%c0_13, %c0_14], %29 {strides = array<i32>} : memref<16x128xf32, #tpu.memory_space<vmem>>, vector<16x128xf32>,
    return
  }
  func.func @transform_0(%arg0: i32) -> (i32, i32) {
    %c0_i32 = arith.constant 0 : i32
    %c0_i32_0 = arith.constant 0 : i32
    return %arg0, %c0_i32 : i32, i32
  }
  func.func @transform_1(%arg0: i32) -> (i32, i32) {
    %c0_i32 = arith.constant 0 : i32
    %c0_i32_0 = arith.constant 0 : i32
    %c0_i32_1 = arith.constant 0 : i32
    return %c0_i32, %c0_i32_0 : i32, i32
  }
  func.func @transform_2(%arg0: i32) -> (i32, i32) {
    %c0_i32 = arith.constant 0 : i32
    %c0_i32_0 = arith.constant 0 : i32
    %c0_i32_1 = arith.constant 0 : i32
    return %c0_i32, %c0_i32_0 : i32, i32
  }
  func.func @transform_3(%arg0: i32) -> (i32, i32) {
    %c0_i32 = arith.constant 0 : i32
    %c0_i32_0 = arith.constant 0 : i32
    return %arg0, %c0_i32 : i32, i32
  }
}

</mosaic_0001>

<llo_original>
// kernel: tpu_custom_call.1
$region0: #{tpu_custom_call.1}
  #allocation0 [shape = 'u32[]', space=smem, size = 0x4, offset = 0x4, fixed_abs, tag = 'smem constant byte address 0x4 - core index']
  #allocation1 [shape = 'u32[144,128]{1,0:T(1,128)}', space=vmem, size = 0x12000, scoped, tag = 'internal scratch']
  %s0 = inlined_call_operand.hbm [shape: f32[16,128], index: 0, kind: input, shape index: {}]
  %s1 = inlined_call_operand.vmem [shape: f32[1,128], index: 1, kind: input, shape index: {}]
  %s2 = inlined_call_operand.vmem [shape: f32[1,128], index: 2, kind: input, shape index: {}]
  %s3 = inlined_call_operand.hbm [shape: f32[16,128], index: 3, kind: output, shape index: {}]
  %s4 = sld [smem:[#allocation0]]
  $region26: #{tpu_custom_call.1} parent=0
    _
  %s6 = ssub.s32 1, %s4
  %s7 = scalar_select 0, %s6, %s4
  $region1: #{tpu_custom_call.1} parent=0
    #allocation2 [shape = 'u8[8192]{0}', space=vmem, size = 0x2000, scoped, tag = 'input window, operand 0, single buffered']
    #allocation3 [shape = 's32[1]{0}', space=sflag, size = 0x4, scoped, tag = 'scoped memory for tpu_custom_call.1']
    #allocation4 [shape = 's32[1]{0}', space=sflag, size = 0x4, scoped, tag = 'scoped memory for tpu_custom_call.1']
    #allocation5 [shape = 'u8[8192]{0}', space=vmem, size = 0x2000, scoped, tag = 'output window, operand 0, single buffered']
    %8 = vsyncpa [#allocation3], 0
    %9 = vsyncpa [#allocation4], 0
    // Predicated region
    $region2: #{tpu_custom_call.1} parent=1 // pred_check
      _
    $region3: #{tpu_custom_call.1} parent=1 // pred_check_branch
      %11 = sbr.rel (0) target = $region5
    $region4: #{tpu_custom_call.1} parent=1 // pred_region
      %s13 = ssub.s32 256, 256
      %14 = vsyncadd [#allocation3], %s13
      %s15 = sshll.u32 [#allocation2], 4
      %s16 = int_to_ptr.vmem [resolvable:$true] %s15
      %21 = dma.hbm_to_vmem [thread:$0]  %s0, 256, %s16, [#allocation3], 128, 128, 8
    $region5: #{tpu_custom_call.1} parent=1 // pred_fallthru
      _
    // Predicated region
    $region6: #{tpu_custom_call.1} parent=1 // pred_check
      _
    $region7: #{tpu_custom_call.1} parent=1 // pred_check_branch
      %23 = sbr.rel (0) target = $region9
    $region8: #{tpu_custom_call.1} parent=1 // pred_region
      _
    $region9: #{tpu_custom_call.1} parent=1 // pred_fallthru
      _
    // Predicated region
    $region10: #{tpu_custom_call.1} parent=1 // pred_check
      _
    $region11: #{tpu_custom_call.1} parent=1 // pred_check_branch
      %25 = sbr.rel (0) target = $region13
    $region12: #{tpu_custom_call.1} parent=1 // pred_region
      _
    $region13: #{tpu_custom_call.1} parent=1 // pred_fallthru
      _
    // Predicated region
    $region14: #{tpu_custom_call.1} parent=1 // pred_check
      _
    $region15: #{tpu_custom_call.1} parent=1 // pred_check_branch
      %27 = sbr.rel (0) target = $region17
    $region16: #{tpu_custom_call.1} parent=1 // pred_region
      %28 = dma.done [#allocation3], 256
    $region17: #{tpu_custom_call.1} parent=1 // pred_fallthru
      _
    %v29 = vld [vmem:[#allocation2] sm:$0xff]
    %v30 = vld [vmem:[#allocation2 + $0x8] sm:$0xff]
    %31 = vadd.xlane.f32.xlu0 %v29
    %v32 = vpop.xlane.xlu0 %31
    %33 = vadd.xlane.f32.xlu0 %v30
    %v34 = vpop.xlane.xlu0 %33
    %v35 = vmul.f32 %v32, 0.03125
    %v36 = vmul.f32 %v34, 0.03125
    %v37 = vsub.f32 %v29, %v35
    %v38 = vsub.f32 %v30, %v36
    %v39 = vmul.f32 %v37, %v37
    %v40 = vmul.f32 %v38, %v38
    %41 = vadd.xlane.f32.xlu0 %v39
    %v42 = vpop.xlane.xlu0 %41
    %43 = vadd.xlane.f32.xlu0 %v40
    %v44 = vpop.xlane.xlu0 %43
    %v45 = vmul.f32 %v35, 96.0
    %v46 = vmul.f32 %v36, 96.0
    %v47 = vmul.f32 %v45, %v35
    %v48 = vmul.f32 %v46, %v36
    %v49 = vsub.f32 %v42, %v47
    %v50 = vsub.f32 %v44, %v48
    %v51 = vmul.f32 %v49, 0.03125
    %v52 = vmul.f32 %v50, 0.03125
    %v53 = vmax.f32 %v51, 0.0
    %v54 = vmax.f32 %v52, 0.0
    %v55 = vadd.f32 %v53, 1e-05
    %v56 = vadd.f32 %v54, 1e-05
    %v57 = vrsqrt.pop %v55
    %v58 = vrsqrt.pop %v56
    %v59 = vld [vmem:[%s1] sm:$0x1]
    %v60 = vld [vmem:[%s2] sm:$0x1]
    %v61 = vmul.f32 %v37, %v57
    %v62 = vmul.f32 %v38, %v58
    %v64 = vlaneseq
    %v65 = vshrl.u32 %v64, 7
    %v66 = vsub.s32 0, %v65
    %v67 = vrot.slane %v59, %v66
    %v69 = vmul.f32 %v61, %v67
    %v70 = vmul.f32 %v62, %v67
    %v72 = vlaneseq
    %v73 = vshrl.u32 %v72, 7
    %v74 = vsub.s32 0, %v73
    %v75 = vrot.slane %v60, %v74
    %v77 = vadd.f32 %v69, %v75
    %v78 = vadd.f32 %v70, %v75
    %79 = vst [vmem:[#allocation5] sm:$0xff] %v77
    %80 = vst [vmem:[#allocation5 + $0x8] sm:$0xff] %v78
    // Predicated region
    $region18: #{tpu_custom_call.1} parent=1 // pred_check
      _
    $region19: #{tpu_custom_call.1} parent=1 // pred_check_branch
      %82 = sbr.rel (0) target = $region21
    $region20: #{tpu_custom_call.1} parent=1 // pred_region
      %s84 = ssub.s32 256, 256
      %85 = vsyncadd [#allocation4], %s84
      %s86 = sshll.u32 [#allocation5], 4
      %s87 = int_to_ptr.vmem [resolvable:$true] %s86
      %92 = dma.vmem_to_hbm [thread:$0]  %s87, 256, %s3, [#allocation4], 128, 128, 8
    $region21: #{tpu_custom_call.1} parent=1 // pred_fallthru
      _
    // Predicated region
    $region22: #{tpu_custom_call.1} parent=1 // pred_check
      _
    $region23: #{tpu_custom_call.1} parent=1 // pred_check_branch
      %94 = sbr.rel (0) target = $region25
    $region24: #{tpu_custom_call.1} parent=1 // pred_region
      %95 = dma.done [#allocation4], 256
    $region25: #{tpu_custom_call.1} parent=1 // pred_fallthru
      _
    %96 = vsyncpa [#allocation3], 1
    %97 = vsyncpa [#allocation4], 1

</llo_original>
